<compile_context>
chip_gen: v7x
topology: tpu7x:2x2x1
jax: 0.10.0
libtpu: 0.0.40
codegen_flags: <defaults>
</compile_context>

<pallas_src>
import math
import functools

import jax
import jax.numpy as jnp
from jax import lax
from jax.experimental import pallas as pl
from jax.experimental.pallas import tpu as pltpu

# ----------------------------- config (small) -----------------------------
B = 2           # batch
SEQ = 8         # stands in for MAX_LEN = 128
VOCAB = 512     # stands in for 32000
HIDDEN = 32
HEADS = 2
HEAD_DIM = HIDDEN // HEADS
INTER = 64
LAYERS = 2
TYPE_VOCAB = 2
OUT_SIZE = 4    # "otuput_size" of the FC head
OUT_PAD = 128   # lane-dense padding for the tiny FC output
LN_EPS = 1e-12


def _row_tile(m, target=256):
    """Largest row-tile <= target that divides m (multiple of 8 when tiling)."""
    if m <= target:
        return m
    for t in range(target, 0, -8):
        if t % 8 == 0 and m % t == 0:
            return t
    return m


def _gelu(x):
    # tanh approximation of BERT's gelu (HF "gelu_new"); exact erf gelu differs slightly.
    return 0.5 * x * (1.0 + jnp.tanh(0.7978845608028654 * (x + 0.044715 * x * x * x)))


# ----------------------------- Pallas kernels -----------------------------

def _make_linear_kernel(act=None, residual=False, layer_norm=False):
    """x @ w + b [-> gelu] [+ residual] [-> layernorm], all in one kernel."""
    def kernel(*refs):
        i = 0
        x_ref = refs[i]; i += 1
        w_ref = refs[i]; i += 1
        b_ref = refs[i]; i += 1
        r_ref = None
        if residual:
            r_ref = refs[i]; i += 1
        if layer_norm:
            g_ref = refs[i]; beta_ref = refs[i + 1]; i += 2
        o_ref = refs[i]

        y = jnp.dot(x_ref[...], w_ref[...],
                    preferred_element_type=jnp.float32) + b_ref[...]
        if act == "gelu":
            y = _gelu(y)
        if residual:
            y = y + r_ref[...].astype(jnp.float32)
        if layer_norm:
            mu = jnp.mean(y, axis=-1, keepdims=True)
            var = jnp.mean((y - mu) * (y - mu), axis=-1, keepdims=True)
            y = (y - mu) * lax.rsqrt(var + LN_EPS) * g_ref[...] + beta_ref[...]
        o_ref[...] = y.astype(o_ref.dtype)
    return kernel


def fused_linear(x, w, b, *, residual=None, ln=None, act=None,
                 out_dtype=jnp.bfloat16, target_tm=256):
    """x:(M,K) @ w:(K,N) + b, optional gelu / residual-add / layernorm epilogue."""
    M, K = x.shape
    N = w.shape[1]
    tm = _row_tile(M, target_tm)

    in_specs = [
        pl.BlockSpec((tm, K), lambda i: (i, 0)),
        pl.BlockSpec((K, N), lambda i: (0, 0)),
        pl.BlockSpec((1, N), lambda i: (0, 0)),
    ]
    args = [x.astype(jnp.bfloat16), w.astype(jnp.bfloat16),
            b.reshape(1, N).astype(jnp.float32)]
    if residual is not None:
        in_specs.append(pl.BlockSpec((tm, N), lambda i: (i, 0)))
        args.append(residual.astype(jnp.bfloat16))
    if ln is not None:
        g, beta = ln
        in_specs += [pl.BlockSpec((1, N), lambda i: (0, 0)),
                     pl.BlockSpec((1, N), lambda i: (0, 0))]
        args += [g.reshape(1, N).astype(jnp.float32),
                 beta.reshape(1, N).astype(jnp.float32)]

    kernel = _make_linear_kernel(act=act, residual=residual is not None,
                                 layer_norm=ln is not None)
    return pl.pallas_call(
        kernel,
        out_shape=jax.ShapeDtypeStruct((M, N), out_dtype),
        grid=(M // tm,),
        in_specs=in_specs,
        out_specs=pl.BlockSpec((tm, N), lambda i: (i, 0)),
        compiler_params=pltpu.CompilerParams(dimension_semantics=("parallel",)),
    )(*args)


def _layernorm_kernel(x_ref, g_ref, b_ref, o_ref):
    x = x_ref[...].astype(jnp.float32)
    mu = jnp.mean(x, axis=-1, keepdims=True)
    var = jnp.mean((x - mu) * (x - mu), axis=-1, keepdims=True)
    o_ref[...] = ((x - mu) * lax.rsqrt(var + LN_EPS) * g_ref[...]
                  + b_ref[...]).astype(o_ref.dtype)


def layernorm(x, g, b, out_dtype=jnp.bfloat16, target_tm=256):
    """x: (M, D), normalize over last dim (used for the embedding LN only)."""
    M, D = x.shape
    tm = _row_tile(M, target_tm)
    return pl.pallas_call(
        _layernorm_kernel,
        out_shape=jax.ShapeDtypeStruct((M, D), out_dtype),
        grid=(M // tm,),
        in_specs=[
            pl.BlockSpec((tm, D), lambda i: (i, 0)),
            pl.BlockSpec((1, D), lambda i: (0, 0)),
            pl.BlockSpec((1, D), lambda i: (0, 0)),
        ],
        out_specs=pl.BlockSpec((tm, D), lambda i: (i, 0)),
        compiler_params=pltpu.CompilerParams(dimension_semantics=("parallel",)),
    )(x.astype(jnp.float32), g.reshape(1, D).astype(jnp.float32),
      b.reshape(1, D).astype(jnp.float32))


def _ffn_kernel(x_ref, wi_ref, bi_ref, wo_ref, bo_ref, g_ref, beta_ref, o_ref):
    """gelu(x@wi + bi) @ wo + bo + x  -> layernorm, all resident in VMEM."""
    x = x_ref[...]
    h = jnp.dot(x, wi_ref[...], preferred_element_type=jnp.float32) + bi_ref[...]
    h = _gelu(h)
    y = jnp.dot(h.astype(jnp.bfloat16), wo_ref[...],
                preferred_element_type=jnp.float32) + bo_ref[...]
    y = y + x.astype(jnp.float32)
    mu = jnp.mean(y, axis=-1, keepdims=True)
    var = jnp.mean((y - mu) * (y - mu), axis=-1, keepdims=True)
    o_ref[...] = ((y - mu) * lax.rsqrt(var + LN_EPS) * g_ref[...]
                  + beta_ref[...]).astype(o_ref.dtype)


def ffn_block(x, wi, bi, wo, bo, g, beta, out_dtype=jnp.bfloat16, target_tm=256):
    M, D = x.shape
    I = wi.shape[1]
    tm = _row_tile(M, target_tm)
    return pl.pallas_call(
        _ffn_kernel,
        out_shape=jax.ShapeDtypeStruct((M, D), out_dtype),
        grid=(M // tm,),
        in_specs=[
            pl.BlockSpec((tm, D), lambda i: (i, 0)),
            pl.BlockSpec((D, I), lambda i: (0, 0)),
            pl.BlockSpec((1, I), lambda i: (0, 0)),
            pl.BlockSpec((I, D), lambda i: (0, 0)),
            pl.BlockSpec((1, D), lambda i: (0, 0)),
            pl.BlockSpec((1, D), lambda i: (0, 0)),
            pl.BlockSpec((1, D), lambda i: (0, 0)),
        ],
        out_specs=pl.BlockSpec((tm, D), lambda i: (i, 0)),
        compiler_params=pltpu.CompilerParams(dimension_semantics=("parallel",)),
    )(x.astype(jnp.bfloat16), wi.astype(jnp.bfloat16),
      bi.reshape(1, I).astype(jnp.float32), wo.astype(jnp.bfloat16),
      bo.reshape(1, D).astype(jnp.float32), g.reshape(1, D).astype(jnp.float32),
      beta.reshape(1, D).astype(jnp.float32))


def _mha_kernel(q_ref, k_ref, v_ref, bias_ref, o_ref, *, scale):
    # All heads of one batch element per grid step. No in-kernel transpose:
    # einsum contracts on the last (head) dim directly.
    q = q_ref[0]          # (H, S, Dh) bf16
    k = k_ref[0]
    v = v_ref[0]
    s = jnp.einsum("hqd,hkd->hqk", q, k,
                   preferred_element_type=jnp.float32) * scale
    s = s + bias_ref[0]   # (H,S,S) + (1,S) broadcast over heads & query rows
    m = jnp.max(s, axis=-1, keepdims=True)
    p = jnp.exp(s - m)
    p = p * pl.reciprocal(jnp.sum(p, axis=-1, keepdims=True), approx=True)
    o = jnp.einsum("hqk,hkd->hqd", p.astype(v.dtype), v,
                   preferred_element_type=jnp.float32)
    o_ref[0] = o.astype(o_ref.dtype)


def mha(q, k, v, mask_bias):
    """q,k,v: (B, H, S, Dh); mask_bias: (B, 1, S) additive (0 keep / -1e4 mask)."""
    Bq, H, S, Dh = q.shape
    scale = 1.0 / math.sqrt(Dh)
    return pl.pallas_call(
        functools.partial(_mha_kernel, scale=scale),
        out_shape=jax.ShapeDtypeStruct((Bq, H, S, Dh), jnp.bfloat16),
        grid=(Bq,),
        in_specs=[
            pl.BlockSpec((1, H, S, Dh), lambda b: (b, 0, 0, 0)),
            pl.BlockSpec((1, H, S, Dh), lambda b: (b, 0, 0, 0)),
            pl.BlockSpec((1, H, S, Dh), lambda b: (b, 0, 0, 0)),
            pl.BlockSpec((1, 1, S), lambda b: (b, 0, 0)),
        ],
        out_specs=pl.BlockSpec((1, H, S, Dh), lambda b: (b, 0, 0, 0)),
        compiler_params=pltpu.CompilerParams(dimension_semantics=("parallel",)),
    )(q.astype(jnp.bfloat16), k.astype(jnp.bfloat16), v.astype(jnp.bfloat16),
      mask_bias.astype(jnp.float32))


def _decoder_fc_kernel(h_ref, emb_ref, mlmb_ref, fcw_ref, fcb_ref, o_ref, acc_ref):
    """Tied MLM decoder (last token only) fused with the final FC head.

    Per vocab tile j:  logits_j = h @ emb_j^T + mlm_bias_j   (B, tn)
                       acc     += logits_j @ fc_w_j          (B, OUT_PAD)
    Last step:         out = acc + fc_b
    """
    j = pl.program_id(0)

    @pl.when(j == 0)
    def _():
        acc_ref[...] = jnp.zeros_like(acc_ref)

    # tok_emb consumed in native (VOCAB, HIDDEN) layout; contract the hidden dim.
    logits = lax.dot_general(
        h_ref[...], emb_ref[...],
        dimension_numbers=(((1,), (1,)), ((), ())),
        preferred_element_type=jnp.float32)
    logits = logits + mlmb_ref[...]
    # TODO(synk): dropout on the logits (self.drop) omitted — inference mode identity.
    acc_ref[...] += jnp.dot(logits.astype(jnp.bfloat16), fcw_ref[...],
                            preferred_element_type=jnp.float32)

    @pl.when(j == pl.num_programs(0) - 1)
    def _():
        o_ref[...] = (acc_ref[...] + fcb_ref[...]).astype(o_ref.dtype)


def decoder_fc_head(h_last, tok_emb, mlm_bias, fc_w, fc_b, tn=256):
    """h_last: (B, D) -> (B, OUT_SIZE). Vocab axis tiled, f32 VMEM accumulator."""
    Bq, D = h_last.shape
    V = tok_emb.shape[0]
    out = fc_w.shape[1]
    tn = min(tn, V)
    assert V % tn == 0 and tn % 128 == 0

    fc_w_pad = jnp.zeros((V, OUT_PAD), jnp.float32).at[:, :out].set(fc_w)
    fc_b_pad = jnp.zeros((1, OUT_PAD), jnp.float32).at[0, :out].set(fc_b)

    res = pl.pallas_call(
        _decoder_fc_kernel,
        out_shape=jax.ShapeDtypeStruct((Bq, OUT_PAD), jnp.float32),
        grid=(V // tn,),
        in_specs=[
            pl.BlockSpec((Bq, D), lambda j: (0, 0)),
            pl.BlockSpec((tn, D), lambda j: (j, 0)),
            pl.BlockSpec((1, tn), lambda j: (0, j)),
            pl.BlockSpec((tn, OUT_PAD), lambda j: (j, 0)),
            pl.BlockSpec((1, OUT_PAD), lambda j: (0, 0)),
        ],
        out_specs=pl.BlockSpec((Bq, OUT_PAD), lambda j: (0, 0)),
        scratch_shapes=[pltpu.VMEM((Bq, OUT_PAD), jnp.float32)],
        compiler_params=pltpu.CompilerParams(
            dimension_semantics=("arbitrary",),
            vmem_limit_bytes=32 * 1024 * 1024),
    )(h_last.astype(jnp.bfloat16), tok_emb.astype(jnp.bfloat16),
      mlm_bias.reshape(1, V).astype(jnp.float32),
      fc_w_pad.astype(jnp.bfloat16), fc_b_pad)
    return res[:, :out]


# ----------------------------- model (glue in JAX) -----------------------------

def init_params(key):
    def nrm(k, shape, scale=0.02):
        return scale * jax.random.normal(k, shape, jnp.float32)

    keys = jax.random.split(key, 12 + LAYERS * 16)
    ki = iter(keys)
    p = {
        "tok_emb": nrm(next(ki), (VOCAB, HIDDEN)),
        "pos_emb": nrm(next(ki), (SEQ, HIDDEN)),
        "type_emb": nrm(next(ki), (TYPE_VOCAB, HIDDEN)),
        "emb_ln_g": jnp.ones((HIDDEN,), jnp.float32),
        "emb_ln_b": jnp.zeros((HIDDEN,), jnp.float32),
        "layers": [],
        # MLM prediction head (transform + tied decoder)
        "mlm_dense_w": nrm(next(ki), (HIDDEN, HIDDEN)),
        "mlm_dense_b": jnp.zeros((HIDDEN,), jnp.float32),
        "mlm_ln_g": jnp.ones((HIDDEN,), jnp.float32),
        "mlm_ln_b": jnp.zeros((HIDDEN,), jnp.float32),
        "mlm_bias": jnp.zeros((VOCAB,), jnp.float32),
        # final classifier head (torch.nn.Linear(32000, output_size))
        "fc_w": nrm(next(ki), (VOCAB, OUT_SIZE)),
        "fc_b": jnp.zeros((OUT_SIZE,), jnp.float32),
    }
    for _ in range(LAYERS):
        p["layers"].append({
            # fused QKV projection weight (D, 3D) = [wq | wk | wv]
            "wqkv": nrm(next(ki), (HIDDEN, 3 * HIDDEN)),
            "bqkv": jnp.zeros((3 * HIDDEN,), jnp.float32),
            "wo": nrm(next(ki), (HIDDEN, HIDDEN)), "bo": jnp.zeros((HIDDEN,), jnp.float32),
            "ln1_g": jnp.ones((HIDDEN,), jnp.float32), "ln1_b": jnp.zeros((HIDDEN,), jnp.float32),
            "wi": nrm(next(ki), (HIDDEN, INTER)), "bi": jnp.zeros((INTER,), jnp.float32),
            "wo2": nrm(next(ki), (INTER, HIDDEN)), "bo2": jnp.zeros((HIDDEN,), jnp.float32),
            "ln2_g": jnp.ones((HIDDEN,), jnp.float32), "ln2_b": jnp.zeros((HIDDEN,), jnp.float32),
        })
    return p


def bert_layer(x, mask_bias, lp):
    """One transformer encoder layer. x: (B, S, D) bf16."""
    Bx, S, D = x.shape
    x2 = x.reshape(Bx * S, D)

    # fused QKV projection: one matmul -> (B*S, 3D)
    qkv = fused_linear(x2, lp["wqkv"], lp["bqkv"])
    qkv = qkv.reshape(Bx, S, 3, HEADS, HEAD_DIM).transpose(2, 0, 3, 1, 4)
    q, k, v = qkv[0], qkv[1], qkv[2]                          # (B, H, S, Dh)

    ctx = mha(q, k, v, mask_bias)                             # (B, H, S, Dh)
    ctx = ctx.transpose(0, 2, 1, 3).reshape(Bx * S, D)

    # attn output projection + residual + LayerNorm fused
    h = fused_linear(ctx, lp["wo"], lp["bo"],
                     residual=x2, ln=(lp["ln1_g"], lp["ln1_b"]))

    # FFN up-proj + gelu + down-proj + residual + LayerNorm fused
    h = ffn_block(h, lp["wi"], lp["bi"], lp["wo2"], lp["bo2"],
                  lp["ln2_g"], lp["ln2_b"])
    return h.reshape(Bx, S, D)


def bert_class_forward(ids, mask, p):
    """Mirrors BERTClass.forward(ids, mask) at inference."""
    Bx, S = ids.shape
    # --- embeddings (gathers are glue; layernorm in Pallas) ---
    x = (jnp.take(p["tok_emb"], ids, axis=0)
         + p["pos_emb"][None, :, :]
         + p["type_emb"][0][None, None, :])
    x = layernorm(x.reshape(Bx * S, HIDDEN),
                  p["emb_ln_g"], p["emb_ln_b"]).reshape(Bx, S, HIDDEN)

    # HF-style additive attention mask: (1 - mask) * -10000, broadcast over heads/queries
    mask_bias = ((1.0 - mask.astype(jnp.float32)) * -10000.0).reshape(Bx, 1, S)

    # --- encoder stack ---
    for lp in p["layers"]:
        x = bert_layer(x, mask_bias, lp)

    # --- MLM head only for the last token: logits[:, S-1] is all that's consumed ---
    h_last = x[:, S - 1]                                      # (B, D)
    h_last = fused_linear(h_last, p["mlm_dense_w"], p["mlm_dense_b"],
                          act="gelu", ln=(p["mlm_ln_g"], p["mlm_ln_b"]))

    # --- tied decoder + dropout(identity) + fc, fused & vocab-tiled ---
    return decoder_fc_head(h_last, p["tok_emb"], p["mlm_bias"],
                           p["fc_w"], p["fc_b"], tn=256)       # (B, OUT_SIZE)


# ----------------------------- main -----------------------------
if __name__ == "__main__":
    key = jax.random.PRNGKey(0)
    k_param, k_ids = jax.random.split(key)
    params = init_params(k_param)

    ids = jax.random.randint(k_ids, (B, SEQ), 0, VOCAB, dtype=jnp.int32)
    mask = jnp.array([[1] * SEQ, [1] * (SEQ - 2) + [0] * 2], dtype=jnp.int32)

    out = bert_class_forward(ids, mask, params)
    out = jax.block_until_ready(out)
    assert out.shape == (B, OUT_SIZE)
    assert jnp.all(jnp.isfinite(out))
    print("KERNEL_OK")
</pallas_src>

<mosaic_0001>
module attributes {stable_mosaic.version = 11 : i64} {
  func.func @_layernorm_kernel(%arg0: i32, %arg1: memref<16x32xf32, #tpu.memory_space<vmem>>, %arg2: memref<1x32xf32, #tpu.memory_space<vmem>>, %arg3: memref<1x32xf32, #tpu.memory_space<vmem>>, %arg4: memref<16x32xbf16, #tpu.memory_space<vmem>>) attributes {dimension_semantics = [#tpu.dimension_semantics<parallel>], iteration_bounds = array<i64: 1>, scalar_prefetch = 0 : i64, scratch_operands = 0 : i64, tpu.core_type = #tpu.core_type<tc>, window_params = [{transform_indices = @transform_0, window_bounds = array<i64: 16, 32>}, {pipeline_mode = #tpu.pipeline_mode<synchronous>, transform_indices = @transform_1, window_bounds = array<i64: 1, 32>}, {pipeline_mode = #tpu.pipeline_mode<synchronous>, transform_indices = @transform_2, window_bounds = array<i64: 1, 32>}, {transform_indices = @transform_3, window_bounds = array<i64: 16, 32>}]} {
    %c0 = arith.constant 0 : index
    %c0_0 = arith.constant 0 : index
    %0 = vector.load %arg1[%c0, %c0_0] : memref<16x32xf32, #tpu.memory_space<vmem>>, vector<16x32xf32>
    %cst = arith.constant dense<0.000000e+00> : vector<16xf32>
    %1 = vector.multi_reduction <add>, %0, %cst [1] : vector<16x32xf32> to vector<16xf32>
    %2 = vector.shape_cast %1 : vector<16xf32> to vector<16x1xf32>
    %cst_1 = arith.constant 3.200000e+01 : f32
    %3 = vector.broadcast %cst_1 : f32 to vector<16x1xf32>
    %4 = arith.divf %2, %3 : vector<16x1xf32>
    %5 = vector.broadcast %4 : vector<16x1xf32> to vector<16x32xf32>
    %6 = arith.subf %0, %5 : vector<16x32xf32>
    %7 = vector.broadcast %4 : vector<16x1xf32> to vector<16x32xf32>
    %8 = arith.subf %0, %7 : vector<16x32xf32>
    %9 = arith.mulf %6, %8 : vector<16x32xf32>
    %cst_2 = arith.constant dense<0.000000e+00> : vector<16xf32>
    %10 = vector.multi_reduction <add>, %9, %cst_2 [1] : vector<16x32xf32> to vector<16xf32>
    %11 = vector.shape_cast %10 : vector<16xf32> to vector<16x1xf32>
    %cst_3 = arith.constant 3.200000e+01 : f32
    %12 = vector.broadcast %cst_3 : f32 to vector<16x1xf32>
    %13 = arith.divf %11, %12 : vector<16x1xf32>
    %14 = vector.broadcast %4 : vector<16x1xf32> to vector<16x32xf32>
    %15 = arith.subf %0, %14 : vector<16x32xf32>
    %cst_4 = arith.constant 9.99999996E-13 : f32
    %16 = vector.broadcast %cst_4 : f32 to vector<16x1xf32>
    %17 = arith.addf %13, %16 : vector<16x1xf32>
    %18 = math.rsqrt %17 : vector<16x1xf32>
    %19 = vector.broadcast %18 : vector<16x1xf32> to vector<16x32xf32>
    %20 = arith.mulf %15, %19 : vector<16x32xf32>
    %c0_5 = arith.constant 0 : index
    %c0_6 = arith.constant 0 : index
    %21 = vector.load %arg2[%c0_5, %c0_6] : memref<1x32xf32, #tpu.memory_space<vmem>>, vector<1x32xf32>
    %22 = vector.broadcast %21 : vector<1x32xf32> to vector<16x32xf32>
    %23 = arith.mulf %20, %22 : vector<16x32xf32>
    %c0_7 = arith.constant 0 : index
    %c0_8 = arith.constant 0 : index
    %24 = vector.load %arg3[%c0_7, %c0_8] : memref<1x32xf32, #tpu.memory_space<vmem>>, vector<1x32xf32>
    %25 = vector.broadcast %24 : vector<1x32xf32> to vector<16x32xf32>
    %26 = arith.addf %23, %25 : vector<16x32xf32>
    %27 = arith.truncf %26 : vector<16x32xf32> to vector<16x32xbf16>
    %c0_9 = arith.constant 0 : index
    %c0_10 = arith.constant 0 : index
    %28 = vector.load %arg4[%c0_9, %c0_10] : memref<16x32xbf16, #tpu.memory_space<vmem>>, vector<16x32xbf16>
    tpu.vector_store %arg4[%c0_9, %c0_10], %27 {strides = array<i32>} : memref<16x32xbf16, #tpu.memory_space<vmem>>, vector<16x32xbf16>,
    return
  }
  func.func @transform_0(%arg0: i32) -> (i32, i32) {
    %c0_i32 = arith.constant 0 : i32
    %c0_i32_0 = arith.constant 0 : i32
    return %arg0, %c0_i32 : i32, i32
  }
  func.func @transform_1(%arg0: i32) -> (i32, i32) {
    %c0_i32 = arith.constant 0 : i32
    %c0_i32_0 = arith.constant 0 : i32
    %c0_i32_1 = arith.constant 0 : i32
    return %c0_i32, %c0_i32_0 : i32, i32
  }
  func.func @transform_2(%arg0: i32) -> (i32, i32) {
    %c0_i32 = arith.constant 0 : i32
    %c0_i32_0 = arith.constant 0 : i32
    %c0_i32_1 = arith.constant 0 : i32
    return %c0_i32, %c0_i32_0 : i32, i32
  }
  func.func @transform_3(%arg0: i32) -> (i32, i32) {
    %c0_i32 = arith.constant 0 : i32
    %c0_i32_0 = arith.constant 0 : i32
    return %arg0, %c0_i32 : i32, i32
  }
}

</mosaic_0001>

<llo_original>
// kernel: tpu_custom_call.1
$region0: #{tpu_custom_call.1}
  #allocation0 [shape = 'u32[]', space=smem, size = 0x4, offset = 0x4, fixed_abs, tag = 'smem constant byte address 0x4 - core index']
  #allocation1 [shape = 'u32[144,128]{1,0:T(1,128)}', space=vmem, size = 0x12000, scoped, tag = 'internal scratch']
  %s0 = inlined_call_operand.hbm [shape: f32[16,32], index: 0, kind: input, shape index: {}]
  %s1 = inlined_call_operand.vmem [shape: f32[1,32], index: 1, kind: input, shape index: {}]
  %s2 = inlined_call_operand.vmem [shape: f32[1,32], index: 2, kind: input, shape index: {}]
  %s3 = inlined_call_operand.hbm [shape: bf16[16,32], index: 3, kind: output, shape index: {}]
  %s4 = sld [smem:[#allocation0]]
  $region26: #{tpu_custom_call.1} parent=0
    _
  %s6 = ssub.s32 1, %s4
  %s7 = scalar_select 0, %s6, %s4
  $region1: #{tpu_custom_call.1} parent=0
    #allocation2 [shape = 'u8[8192]{0}', space=vmem, size = 0x2000, scoped, tag = 'input window, operand 0, single buffered']
    #allocation3 [shape = 's32[1]{0}', space=sflag, size = 0x4, scoped, tag = 'scoped memory for tpu_custom_call.1']
    #allocation4 [shape = 's32[1]{0}', space=sflag, size = 0x4, scoped, tag = 'scoped memory for tpu_custom_call.1']
    #allocation5 [shape = 'u8[4096]{0}', space=vmem, size = 0x1000, scoped, tag = 'output window, operand 0, single buffered']
    %8 = vsyncpa [#allocation3], 0
    %9 = vsyncpa [#allocation4], 0
    // Predicated region
    $region2: #{tpu_custom_call.1} parent=1 // pred_check
      _
    $region3: #{tpu_custom_call.1} parent=1 // pred_check_branch
      %11 = sbr.rel (0) target = $region5
    $region4: #{tpu_custom_call.1} parent=1 // pred_region
      %s13 = ssub.s32 256, 256
      %14 = vsyncadd [#allocation3], %s13
      %s15 = sshll.u32 [#allocation2], 4
      %s16 = int_to_ptr.vmem [resolvable:$true] %s15
      %21 = dma.hbm_to_vmem [thread:$0]  %s0, 256, %s16, [#allocation3], 128, 128, 8
    $region5: #{tpu_custom_call.1} parent=1 // pred_fallthru
      _
    // Predicated region
    $region6: #{tpu_custom_call.1} parent=1 // pred_check
      _
    $region7: #{tpu_custom_call.1} parent=1 // pred_check_branch
      %23 = sbr.rel (0) target = $region9
    $region8: #{tpu_custom_call.1} parent=1 // pred_region
      _
    $region9: #{tpu_custom_call.1} parent=1 // pred_fallthru
      _
    // Predicated region
    $region10: #{tpu_custom_call.1} parent=1 // pred_check
      _
    $region11: #{tpu_custom_call.1} parent=1 // pred_check_branch
      %25 = sbr.rel (0) target = $region13
    $region12: #{tpu_custom_call.1} parent=1 // pred_region
      _
    $region13: #{tpu_custom_call.1} parent=1 // pred_fallthru
      _
    // Predicated region
    $region14: #{tpu_custom_call.1} parent=1 // pred_check
      _
    $region15: #{tpu_custom_call.1} parent=1 // pred_check_branch
      %27 = sbr.rel (0) target = $region17
    $region16: #{tpu_custom_call.1} parent=1 // pred_region
      %28 = dma.done [#allocation3], 256
    $region17: #{tpu_custom_call.1} parent=1 // pred_fallthru
      _
    %v29 = vld [vmem:[#allocation2] sm:$0xff]
    %v30 = vld [vmem:[#allocation2 + $0x8] sm:$0xff]
    %vm31 = vcmask 261120
    %v32 = vsel %vm31, %v29, 0.0
    %33 = vadd.xlane.f32.xlu0 %v32
    %v34 = vpop.xlane.xlu0 %33
    %v35 = vsel %vm31, %v30, 0.0
    %36 = vadd.xlane.f32.xlu0 %v35
    %v37 = vpop.xlane.xlu0 %36
    %v38 = vrcp.pop 32.0
    %v39 = vmul.f32 %v34, %v38
    %v40 = vmul.f32 %v37, %v38
    %v41 = vsub.f32 %v29, %v39
    %v42 = vsub.f32 %v30, %v40
    %v43 = vmul.f32 %v41, %v41
    %v44 = vmul.f32 %v42, %v42
    %v45 = vsel %vm31, %v43, 0.0
    %46 = vadd.xlane.f32.xlu0 %v45
    %v47 = vpop.xlane.xlu0 %46
    %v48 = vsel %vm31, %v44, 0.0
    %49 = vadd.xlane.f32.xlu0 %v48
    %v50 = vpop.xlane.xlu0 %49
    %v51 = vmul.f32 %v47, %v38
    %v52 = vmul.f32 %v50, %v38
    %v53 = vadd.f32 %v51, 1e-12
    %v54 = vadd.f32 %v52, 1e-12
    %v55 = vrsqrt.pop %v53
    %v56 = vrsqrt.pop %v54
    %v57 = vmul.f32 %v41, %v55
    %v58 = vmul.f32 %v42, %v56
    %v59 = vld [vmem:[%s1] sm:$0x1]
    %v61 = vlaneseq
    %v62 = vshrl.u32 %v61, 7
    %v63 = vsub.s32 0, %v62
    %v64 = vrot.slane %v59, %v63
    %v66 = vmul.f32 %v57, %v64
    %v67 = vmul.f32 %v58, %v64
    %v68 = vld [vmem:[%s2] sm:$0x1]
    %v70 = vlaneseq
    %v71 = vshrl.u32 %v70, 7
    %v72 = vsub.s32 0, %v71
    %v73 = vrot.slane %v68, %v72
    %v75 = vadd.f32 %v66, %v73
    %v76 = vadd.f32 %v67, %v73
    %v77 = vpack.c.bf16 %v76, %v75
    %v79 = vunpack.c.l.b16 %v77
    %v80 = vunpack.c.h.b16 %v77
    %v81 = vpack.c.b16 %v79, %v79
    %v82 = vpack.c.b16 %v80, %v80
    %vm85 = vcmask 257024
    %86 = vst.msk [vmem:[#allocation5] sm:$0xf] %vm85, %v81
    %87 = vst.msk [vmem:[#allocation5 + $0x4] sm:$0xf] %vm85, %v82
    // Predicated region
    $region18: #{tpu_custom_call.1} parent=1 // pred_check
      _
    $region19: #{tpu_custom_call.1} parent=1 // pred_check_branch
      %89 = sbr.rel (0) target = $region21
    $region20: #{tpu_custom_call.1} parent=1 // pred_region
      %s91 = ssub.s32 128, 128
      %92 = vsyncadd [#allocation4], %s91
      %s93 = sshll.u32 [#allocation5], 4
      %s94 = int_to_ptr.vmem [resolvable:$true] %s93
      %99 = dma.vmem_to_hbm [thread:$0]  %s94, 128, %s3, [#allocation4], 64, 64, 4
    $region21: #{tpu_custom_call.1} parent=1 // pred_fallthru
      _
    // Predicated region
    $region22: #{tpu_custom_call.1} parent=1 // pred_check
      _
    $region23: #{tpu_custom_call.1} parent=1 // pred_check_branch
      %101 = sbr.rel (0) target = $region25
    $region24: #{tpu_custom_call.1} parent=1 // pred_region
      %102 = dma.done [#allocation4], 128
    $region25: #{tpu_custom_call.1} parent=1 // pred_fallthru
      _
    %103 = vsyncpa [#allocation3], 1
    %104 = vsyncpa [#allocation4], 1

</llo_original>
